<compile_context>
chip_gen: v6e
topology: v6e:2x2x1
jax: 0.10.0
libtpu: 0.0.40
codegen_flags: <defaults>
</compile_context>

<pallas_src>
import jax
import jax.numpy as jnp
from jax.experimental import pallas as pl
from jax.experimental.pallas import tpu as pltpu

_H = 128        # hidden width of fc1/fc2
_OUT_PAD = 8    # stored fc3 output width (true out dim = 3, zero-padded to 8)


def _round_up(a, b):
    return (a + b - 1) // b * b


def _cores_per_chip():
    """TensorCores per chip: 2 on v7x, 1 on v5e/v6e.  Heuristic on device_kind."""
    try:
        kind = jax.devices()[0].device_kind.lower()
    except Exception:
        return 1
    return 2 if "7" in kind else 1


def foldingnet_kernel(x_ref, w1_ref, b1_ref, w2_ref, b2_ref, w3_ref, b3_ref,
                      out_ref, feat_ref):
    # fc1: in-kernel f32->bf16 cast of x, bf16 matmul on MXU, f32 accumulate + bias + ReLU
    x = x_ref[...].astype(jnp.bfloat16)                              # (tm, K) bf16
    h1 = jnp.dot(x, w1_ref[...], preferred_element_type=jnp.float32) + b1_ref[...]
    h1 = jnp.maximum(h1, 0.0)

    # fc2 (re-cast activation to bf16 for the MXU)
    h2 = jnp.dot(h1.astype(jnp.bfloat16), w2_ref[...],
                 preferred_element_type=jnp.float32) + b2_ref[...]
    h2 = jnp.maximum(h2, 0.0)                                        # x_feat (f32)

    # x_feat writeback in bf16 (same cast that feeds fc3 -> no extra VPU work)
    h2b = h2.astype(jnp.bfloat16)
    feat_ref[...] = h2b

    # fc3 (128 -> 8 padded; only first 3 columns are meaningful)
    out_ref[...] = (jnp.dot(h2b, w3_ref[...],
                            preferred_element_type=jnp.float32) + b3_ref[...])


def prepare_params(params, indim):
    """One-time dtype casting / padding of nn.Linear-style params.

    params: (w1 (indim,128), b1 (128,), w2 (128,128), b2 (128,), w3 (128,3), b3 (3,))
    Returns kernel-ready params (weights bf16, biases f32 row vectors, fc3 padded to 8 cols).
    W1 is kept unpadded: the kernel uses a full-extent K block, so ragged indim is legal.
    """
    w1, b1, w2, b2, w3, b3 = params
    assert w1.shape == (indim, _H)

    w3p = jnp.zeros((_H, _OUT_PAD), jnp.float32).at[:, :3].set(w3)
    b3p = jnp.zeros((1, _OUT_PAD), jnp.float32).at[:, :3].set(b3.reshape(1, 3))

    return (w1.astype(jnp.bfloat16),
            b1.reshape(1, _H).astype(jnp.float32),
            w2.astype(jnp.bfloat16),
            b2.reshape(1, _H).astype(jnp.float32),
            w3p.astype(jnp.bfloat16),
            b3p.astype(jnp.float32))


def foldingnet_forward(x, prepared_params, *, tm=2048):
    """x: (M, indim) float32.  Returns (out (M, 3) f32, x_feat (M, 128) bf16)."""
    w1, b1, w2, b2, w3p, b3p = prepared_params
    M, indim = x.shape
    assert w1.shape[0] == indim

    n_cores = _cores_per_chip()

    # Row tile: as large as possible (amortize ~0.35us/grid-step), capped so the
    # double-buffered per-step working set stays within a conservative VMEM budget.
    # per-row bytes: 2x x-tile (f32) + 2x feat-tile (bf16) + 2x out-tile (f32)
    vmem_budget = 32 * 1024 * 1024
    per_row = 2 * (4 * indim + 2 * _H + 4 * _OUT_PAD)
    tm_cap = max(256, (vmem_budget // per_row) // 16 * 16)
    tm_eff = min(_round_up(tm, 16), tm_cap)

    if tm_eff >= M:
        if n_cores > 1 and M > 1024:
            # v7x: split a fits-in-one-tile problem across the two TensorCores.
            tm_eff = max(16, _round_up(pl.cdiv(M, 2), 16))
        else:
            # single-TC chips (v5e/v6e) or tiny M: one maximal tile, one grid step.
            tm_eff = M
    else:
        num_steps = pl.cdiv(M, tm_eff)
        if n_cores > 1 and num_steps > 1 and num_steps % n_cores:
            # v7x: aim for an even step count so neither TensorCore idles on the tail.
            target = _round_up(num_steps, n_cores)
            tm_eff = max(16, _round_up(pl.cdiv(M, target), 16))

    grid = (pl.cdiv(M, tm_eff),)

    out_pad, feat = pl.pallas_call(
        foldingnet_kernel,
        out_shape=(jax.ShapeDtypeStruct((M, _OUT_PAD), jnp.float32),
                   jax.ShapeDtypeStruct((M, _H), jnp.bfloat16)),
        grid_spec=pltpu.PrefetchScalarGridSpec(
            num_scalar_prefetch=0,
            grid=grid,
            in_specs=[
                # x tile: f32, full-extent (possibly ragged) K block -> no wrapper pad/cast.
                pl.BlockSpec((tm_eff, indim), lambda i: (i, 0)),
                # Weights/biases have constant index_maps -> resident across grid steps.
                pl.BlockSpec((indim, _H), lambda i: (0, 0)),       # W1 (bf16)
                pl.BlockSpec((1, _H), lambda i: (0, 0)),           # b1 (f32)
                pl.BlockSpec((_H, _H), lambda i: (0, 0)),          # W2 (bf16)
                pl.BlockSpec((1, _H), lambda i: (0, 0)),           # b2 (f32)
                pl.BlockSpec((_H, _OUT_PAD), lambda i: (0, 0)),    # W3 padded (bf16)
                pl.BlockSpec((1, _OUT_PAD), lambda i: (0, 0)),     # b3 padded (f32)
            ],
            out_specs=[
                pl.BlockSpec((tm_eff, _OUT_PAD), lambda i: (i, 0)),  # fc3 out (narrow, f32)
                pl.BlockSpec((tm_eff, _H), lambda i: (i, 0)),        # x_feat (bf16)
            ],
        ),
        compiler_params=pltpu.CompilerParams(
            dimension_semantics=("parallel",),
            vmem_limit_bytes=48 * 1024 * 1024),
    )(x, w1, b1, w2, b2, w3p, b3p)

    return out_pad[:, :3], feat


def init_params(key, indim):
    """Deterministic synthetic init matching nn.Linear shapes (stored transposed)."""
    ks = jax.random.split(key, 6)

    def unif(k, shape, fan_in):
        bound = 1.0 / jnp.sqrt(fan_in)
        return jax.random.uniform(k, shape, jnp.float32, -bound, bound)

    w1 = unif(ks[0], (indim, _H), indim)   # fc1.weight.T
    b1 = unif(ks[1], (_H,), indim)
    w2 = unif(ks[2], (_H, _H), _H)         # fc2.weight.T
    b2 = unif(ks[3], (_H,), _H)
    w3 = unif(ks[4], (_H, 3), _H)          # fc3.weight.T
    b3 = unif(ks[5], (3,), _H)
    return (w1, b1, w2, b2, w3, b3)


def reference_forward(x, params):
    """Plain-JAX reference with the same numerics (bf16 operands, f32 accumulation)."""
    w1, b1, w2, b2, w3, b3 = params
    xb = x.astype(jnp.bfloat16)
    h1 = jax.nn.relu(jnp.dot(xb, w1.astype(jnp.bfloat16),
                             preferred_element_type=jnp.float32) + b1)
    h2 = jax.nn.relu(jnp.dot(h1.astype(jnp.bfloat16), w2.astype(jnp.bfloat16),
                             preferred_element_type=jnp.float32) + b2)
    out = jnp.dot(h2.astype(jnp.bfloat16), w3.astype(jnp.bfloat16),
                  preferred_element_type=jnp.float32) + b3
    return out, h2


if __name__ == "__main__":
    key = jax.random.PRNGKey(0)
    kx, kp = jax.random.split(key)

    indim = 32
    M = 16  # e.g. batch=2 * 8 points flattened to rows
    x = jax.random.normal(kx, (M, indim), jnp.float32)
    params = init_params(kp, indim)
    prepared = prepare_params(params, indim)

    out, feat = foldingnet_forward(x, prepared)
    out = jax.block_until_ready(out)
    feat = jax.block_until_ready(feat)

    # sanity check against plain-JAX reference (same bf16-operand / f32-acc numerics;
    # feat is returned in bf16, so compare with a correspondingly looser tolerance)
    ref_out, ref_feat = reference_forward(x, params)
    assert out.shape == (M, 3) and feat.shape == (M, _H)
    assert feat.dtype == jnp.bfloat16
    assert jnp.allclose(out, ref_out, atol=2e-3, rtol=2e-3)
    assert jnp.allclose(feat.astype(jnp.float32), ref_feat, atol=1e-2, rtol=1e-2)

    print("KERNEL_OK")
</pallas_src>

<mosaic_0001>
module attributes {stable_mosaic.version = 11 : i64} {
  func.func @foldingnet_kernel(%arg0: i32, %arg1: memref<16x32xf32, #tpu.memory_space<vmem>>, %arg2: memref<32x128xbf16, #tpu.memory_space<vmem>>, %arg3: memref<1x128xf32, #tpu.memory_space<vmem>>, %arg4: memref<128x128xbf16, #tpu.memory_space<vmem>>, %arg5: memref<1x128xf32, #tpu.memory_space<vmem>>, %arg6: memref<128x8xbf16, #tpu.memory_space<vmem>>, %arg7: memref<1x8xf32, #tpu.memory_space<vmem>>, %arg8: memref<16x8xf32, #tpu.memory_space<vmem>>, %arg9: memref<16x128xbf16, #tpu.memory_space<vmem>>) attributes {dimension_semantics = [#tpu.dimension_semantics<parallel>], iteration_bounds = array<i64: 1>, scalar_prefetch = 0 : i64, scratch_operands = 0 : i64, tpu.core_type = #tpu.core_type<tc>, window_params = [{transform_indices = @transform_0, window_bounds = array<i64: 16, 32>}, {pipeline_mode = #tpu.pipeline_mode<synchronous>, transform_indices = @transform_1, window_bounds = array<i64: 32, 128>}, {pipeline_mode = #tpu.pipeline_mode<synchronous>, transform_indices = @transform_2, window_bounds = array<i64: 1, 128>}, {pipeline_mode = #tpu.pipeline_mode<synchronous>, transform_indices = @transform_3, window_bounds = array<i64: 128, 128>}, {pipeline_mode = #tpu.pipeline_mode<synchronous>, transform_indices = @transform_4, window_bounds = array<i64: 1, 128>}, {pipeline_mode = #tpu.pipeline_mode<synchronous>, transform_indices = @transform_5, window_bounds = array<i64: 128, 8>}, {pipeline_mode = #tpu.pipeline_mode<synchronous>, transform_indices = @transform_6, window_bounds = array<i64: 1, 8>}, {transform_indices = @transform_7, window_bounds = array<i64: 16, 8>}, {transform_indices = @transform_8, window_bounds = array<i64: 16, 128>}]} {
    %c0 = arith.constant 0 : index
    %c0_0 = arith.constant 0 : index
    %0 = vector.load %arg1[%c0, %c0_0] : memref<16x32xf32, #tpu.memory_space<vmem>>, vector<16x32xf32>
    %1 = arith.truncf %0 : vector<16x32xf32> to vector<16x32xbf16>
    %c0_1 = arith.constant 0 : index
    %c0_2 = arith.constant 0 : index
    %2 = vector.load %arg2[%c0_1, %c0_2] : memref<32x128xbf16, #tpu.memory_space<vmem>>, vector<32x128xbf16>
    %cst = arith.constant dense<0.000000e+00> : vector<16x128xf32>
    %3 = tpu.matmul %1, %2, %cst {dimension_numbers = #tpu.dot_dimension_numbers<[1], [0], [0], [1], [0, 0, 1, 1], [], []>} : vector<16x32xbf16>, vector<32x128xbf16>, vector<16x128xf32> -> vector<16x128xf32>
    %c0_3 = arith.constant 0 : index
    %c0_4 = arith.constant 0 : index
    %4 = vector.load %arg3[%c0_3, %c0_4] : memref<1x128xf32, #tpu.memory_space<vmem>>, vector<1x128xf32>
    %5 = vector.broadcast %4 : vector<1x128xf32> to vector<16x128xf32>
    %6 = arith.addf %3, %5 : vector<16x128xf32>
    %cst_5 = arith.constant 0.000000e+00 : f32
    %7 = vector.broadcast %cst_5 : f32 to vector<16x128xf32>
    %8 = arith.maximumf %6, %7 : vector<16x128xf32>
    %9 = arith.truncf %8 : vector<16x128xf32> to vector<16x128xbf16>
    %c0_6 = arith.constant 0 : index
    %c0_7 = arith.constant 0 : index
    %10 = vector.load %arg4[%c0_6, %c0_7] : memref<128x128xbf16, #tpu.memory_space<vmem>>, vector<128x128xbf16>
    %cst_8 = arith.constant dense<0.000000e+00> : vector<16x128xf32>
    %11 = tpu.matmul %9, %10, %cst_8 {dimension_numbers = #tpu.dot_dimension_numbers<[1], [0], [0], [1], [0, 0, 1, 1], [], []>} : vector<16x128xbf16>, vector<128x128xbf16>, vector<16x128xf32> -> vector<16x128xf32>
    %c0_9 = arith.constant 0 : index
    %c0_10 = arith.constant 0 : index
    %12 = vector.load %arg5[%c0_9, %c0_10] : memref<1x128xf32, #tpu.memory_space<vmem>>, vector<1x128xf32>
    %13 = vector.broadcast %12 : vector<1x128xf32> to vector<16x128xf32>
    %14 = arith.addf %11, %13 : vector<16x128xf32>
    %cst_11 = arith.constant 0.000000e+00 : f32
    %15 = vector.broadcast %cst_11 : f32 to vector<16x128xf32>
    %16 = arith.maximumf %14, %15 : vector<16x128xf32>
    %17 = arith.truncf %16 : vector<16x128xf32> to vector<16x128xbf16>
    %c0_12 = arith.constant 0 : index
    %c0_13 = arith.constant 0 : index
    %18 = vector.load %arg9[%c0_12, %c0_13] : memref<16x128xbf16, #tpu.memory_space<vmem>>, vector<16x128xbf16>
    tpu.vector_store %arg9[%c0_12, %c0_13], %17 {strides = array<i32>} : memref<16x128xbf16, #tpu.memory_space<vmem>>, vector<16x128xbf16>,
    %c0_14 = arith.constant 0 : index
    %c0_15 = arith.constant 0 : index
    %19 = vector.load %arg6[%c0_14, %c0_15] : memref<128x8xbf16, #tpu.memory_space<vmem>>, vector<128x8xbf16>
    %cst_16 = arith.constant dense<0.000000e+00> : vector<16x8xf32>
    %20 = tpu.matmul %17, %19, %cst_16 {dimension_numbers = #tpu.dot_dimension_numbers<[1], [0], [0], [1], [0, 0, 1, 1], [], []>} : vector<16x128xbf16>, vector<128x8xbf16>, vector<16x8xf32> -> vector<16x8xf32>
    %c0_17 = arith.constant 0 : index
    %c0_18 = arith.constant 0 : index
    %21 = vector.load %arg7[%c0_17, %c0_18] : memref<1x8xf32, #tpu.memory_space<vmem>>, vector<1x8xf32>
    %22 = vector.broadcast %21 : vector<1x8xf32> to vector<16x8xf32>
    %23 = arith.addf %20, %22 : vector<16x8xf32>
    %c0_19 = arith.constant 0 : index
    %c0_20 = arith.constant 0 : index
    %24 = vector.load %arg8[%c0_19, %c0_20] : memref<16x8xf32, #tpu.memory_space<vmem>>, vector<16x8xf32>
    tpu.vector_store %arg8[%c0_19, %c0_20], %23 {strides = array<i32>} : memref<16x8xf32, #tpu.memory_space<vmem>>, vector<16x8xf32>,
    return
  }
  func.func @transform_0(%arg0: i32) -> (i32, i32) {
    %c0_i32 = arith.constant 0 : i32
    %c0_i32_0 = arith.constant 0 : i32
    return %arg0, %c0_i32 : i32, i32
  }
  func.func @transform_1(%arg0: i32) -> (i32, i32) {
    %c0_i32 = arith.constant 0 : i32
    %c0_i32_0 = arith.constant 0 : i32
    %c0_i32_1 = arith.constant 0 : i32
    return %c0_i32, %c0_i32_0 : i32, i32
  }
  func.func @transform_2(%arg0: i32) -> (i32, i32) {
    %c0_i32 = arith.constant 0 : i32
    %c0_i32_0 = arith.constant 0 : i32
    %c0_i32_1 = arith.constant 0 : i32
    return %c0_i32, %c0_i32_0 : i32, i32
  }
  func.func @transform_3(%arg0: i32) -> (i32, i32) {
    %c0_i32 = arith.constant 0 : i32
    %c0_i32_0 = arith.constant 0 : i32
    %c0_i32_1 = arith.constant 0 : i32
    return %c0_i32, %c0_i32_0 : i32, i32
  }
  func.func @transform_4(%arg0: i32) -> (i32, i32) {
    %c0_i32 = arith.constant 0 : i32
    %c0_i32_0 = arith.constant 0 : i32
    %c0_i32_1 = arith.constant 0 : i32
    return %c0_i32, %c0_i32_0 : i32, i32
  }
  func.func @transform_5(%arg0: i32) -> (i32, i32) {
    %c0_i32 = arith.constant 0 : i32
    %c0_i32_0 = arith.constant 0 : i32
    %c0_i32_1 = arith.constant 0 : i32
    return %c0_i32, %c0_i32_0 : i32, i32
  }
  func.func @transform_6(%arg0: i32) -> (i32, i32) {
    %c0_i32 = arith.constant 0 : i32
    %c0_i32_0 = arith.constant 0 : i32
    %c0_i32_1 = arith.constant 0 : i32
    return %c0_i32, %c0_i32_0 : i32, i32
  }
  func.func @transform_7(%arg0: i32) -> (i32, i32) {
    %c0_i32 = arith.constant 0 : i32
    %c0_i32_0 = arith.constant 0 : i32
    return %arg0, %c0_i32 : i32, i32
  }
  func.func @transform_8(%arg0: i32) -> (i32, i32) {
    %c0_i32 = arith.constant 0 : i32
    %c0_i32_0 = arith.constant 0 : i32
    return %arg0, %c0_i32 : i32, i32
  }
}

</mosaic_0001>

<llo_original>
// kernel: tpu_custom_call.1
$region0: #{tpu_custom_call.1}
  #allocation0 [shape = 'u32[]', space=smem, size = 0x4, offset = 0x4, fixed_abs, tag = 'smem constant byte address 0x4 - core index']
  #allocation1 [shape = 'u32[144,128]{1,0:T(1,128)}', space=vmem, size = 0x12000, scoped, tag = 'internal scratch']
  %s0 = inlined_call_operand.hbm [shape: f32[16,32], index: 0, kind: input, shape index: {}]
  %s1 = inlined_call_operand.hbm [shape: bf16[32,128], index: 1, kind: input, shape index: {}]
  %s2 = inlined_call_operand.vmem [shape: f32[1,128], index: 2, kind: input, shape index: {}]
  %s3 = inlined_call_operand.vmem [shape: bf16[128,128], index: 3, kind: input, shape index: {}]
  %s4 = inlined_call_operand.vmem [shape: f32[1,128], index: 4, kind: input, shape index: {}]
  %s5 = inlined_call_operand.vmem [shape: bf16[128,8], index: 5, kind: input, shape index: {}]
  %s6 = inlined_call_operand.vmem [shape: f32[1,8], index: 6, kind: input, shape index: {}]
  %s7 = inlined_call_operand.vmem [shape: f32[16,8], index: 7, kind: output, shape index: {0}]
  %s8 = inlined_call_operand.hbm [shape: bf16[16,128], index: 8, kind: output, shape index: {1}]
  %9 = xla_tuple %s7, %s8
  %s10 = sld [smem:[#allocation0]]
  $region54: #{tpu_custom_call.1} parent=0
    _
  %s12 = ssub.s32 1, %s10
  %s13 = scalar_select 0, %s12, %s10
  $region1: #{tpu_custom_call.1} parent=0
    #allocation2 [shape = 'u8[8192]{0}', space=vmem, size = 0x2000, scoped, tag = 'input window, operand 0, single buffered']
    #allocation3 [shape = 's32[1]{0}', space=sflag, size = 0x4, scoped, tag = 'scoped memory for tpu_custom_call.1']
    #allocation4 [shape = 's32[1]{0}', space=sflag, size = 0x4, scoped, tag = 'scoped memory for tpu_custom_call.1']
    #allocation5 [shape = 'u8[8192]{0}', space=vmem, size = 0x2000, scoped, tag = 'input window, operand 1, single buffered']
    #allocation6 [shape = 's32[1]{0}', space=sflag, size = 0x4, scoped, tag = 'scoped memory for tpu_custom_call.1']
    #allocation7 [shape = 'u8[4096]{0}', space=vmem, size = 0x1000, scoped, tag = 'output window, operand 1, single buffered']
    %14 = vsyncpa [#allocation3], 0
    %15 = vsyncpa [#allocation6], 0
    %16 = vsyncpa [#allocation4], 0
    // Predicated region
    $region2: #{tpu_custom_call.1} parent=1 // pred_check
      _
    $region3: #{tpu_custom_call.1} parent=1 // pred_check_branch
      %18 = sbr.rel (0) target = $region5
    $region4: #{tpu_custom_call.1} parent=1 // pred_region
      %s20 = ssub.s32 256, 256
      %21 = vsyncadd [#allocation3], %s20
      %s22 = sshll.u32 [#allocation2], 4
      %s23 = int_to_ptr.vmem [resolvable:$true] %s22
      %28 = dma.hbm_to_vmem [thread:$0]  %s0, 256, %s23, [#allocation3], 128, 128, 8
    $region5: #{tpu_custom_call.1} parent=1 // pred_fallthru
      _
    // Predicated region
    $region6: #{tpu_custom_call.1} parent=1 // pred_check
      _
    $region7: #{tpu_custom_call.1} parent=1 // pred_check_branch
      %30 = sbr.rel (0) target = $region9
    $region8: #{tpu_custom_call.1} parent=1 // pred_region
      %s32 = ssub.s32 256, 256
      %33 = vsyncadd [#allocation6], %s32
      %s34 = sshll.u32 [#allocation5], 4
      %s35 = int_to_ptr.vmem [resolvable:$true] %s34
      %40 = dma.hbm_to_vmem [thread:$0]  %s1, 256, %s35, [#allocation6], 64, 64, 4
    $region9: #{tpu_custom_call.1} parent=1 // pred_fallthru
      _
    // Predicated region
    $region10: #{tpu_custom_call.1} parent=1 // pred_check
      _
    $region11: #{tpu_custom_call.1} parent=1 // pred_check_branch
      %42 = sbr.rel (0) target = $region13
    $region12: #{tpu_custom_call.1} parent=1 // pred_region
      _
    $region13: #{tpu_custom_call.1} parent=1 // pred_fallthru
      _
    // Predicated region
    $region14: #{tpu_custom_call.1} parent=1 // pred_check
      _
    $region15: #{tpu_custom_call.1} parent=1 // pred_check_branch
      %44 = sbr.rel (0) target = $region17
    $region16: #{tpu_custom_call.1} parent=1 // pred_region
      _
    $region17: #{tpu_custom_call.1} parent=1 // pred_fallthru
      _
    // Predicated region
    $region18: #{tpu_custom_call.1} parent=1 // pred_check
      _
    $region19: #{tpu_custom_call.1} parent=1 // pred_check_branch
      %46 = sbr.rel (0) target = $region21
    $region20: #{tpu_custom_call.1} parent=1 // pred_region
      _
    $region21: #{tpu_custom_call.1} parent=1 // pred_fallthru
      _
    // Predicated region
    $region22: #{tpu_custom_call.1} parent=1 // pred_check
      _
    $region23: #{tpu_custom_call.1} parent=1 // pred_check_branch
      %48 = sbr.rel (0) target = $region25
    $region24: #{tpu_custom_call.1} parent=1 // pred_region
      _
    $region25: #{tpu_custom_call.1} parent=1 // pred_fallthru
      _
    // Predicated region
    $region26: #{tpu_custom_call.1} parent=1 // pred_check
      _
    $region27: #{tpu_custom_call.1} parent=1 // pred_check_branch
      %50 = sbr.rel (0) target = $region29
    $region28: #{tpu_custom_call.1} parent=1 // pred_region
      _
    $region29: #{tpu_custom_call.1} parent=1 // pred_fallthru
      _
    // Predicated region
    $region30: #{tpu_custom_call.1} parent=1 // pred_check
      _
    $region31: #{tpu_custom_call.1} parent=1 // pred_check_branch
      %52 = sbr.rel (0) target = $region33
    $region32: #{tpu_custom_call.1} parent=1 // pred_region
      %53 = dma.done [#allocation3], 256
    $region33: #{tpu_custom_call.1} parent=1 // pred_fallthru
      _
    // Predicated region
    $region34: #{tpu_custom_call.1} parent=1 // pred_check
      _
    $region35: #{tpu_custom_call.1} parent=1 // pred_check_branch
      %55 = sbr.rel (0) target = $region37
    $region36: #{tpu_custom_call.1} parent=1 // pred_region
      %56 = dma.done [#allocation6], 256
    $region37: #{tpu_custom_call.1} parent=1 // pred_fallthru
      _
    %v58 = vld [vmem:[#allocation2] sm:$0xff]
    %v59 = vld [vmem:[#allocation2 + $0x8] sm:$0xff]
    %v60 = vpack.c.bf16 %v59, %v58
    %v61 = vld [vmem:[#allocation5] sm:$0xf]
    %v62 = vld [vmem:[#allocation5 + $0x4] sm:$0xf]
    %v63 = vld [vmem:[#allocation5 + $0x8] sm:$0xf]
    %v64 = vld [vmem:[#allocation5 + $0xc] sm:$0xf]
    %v65 = vld [vmem:[%s2] sm:$0x1]
    %v67 = vlaneseq
    %v68 = vshrl.u32 %v67, 7
    %v69 = vsub.s32 0, %v68
    %v70 = vrot.slane %v65, %v69
    %v76 = vunpack.c.l.b16 %v61
    %v77 = vunpack.c.l.b16 %v62
    %v78 = vunpack.c.l.b16 %v63
    %v79 = vunpack.c.l.b16 %v64
    %v80 = vpack.c.b16 %v77, %v76
    %v81 = vpack.c.b16 %v79, %v78
    %vm84 = vcmask 261120
    %v86 = vsel %vm84, %v60, 0
    %88 = vmatprep.subr.bf16.mxu0 0
    %89 = vmatpush1.bf16.msra.mxu0 0
    %90 = vmatprep.subr.bf16.mxu0 0
    %91 = vmatpush1.bf16.msra.mxu0 0
    %92 = vmatprep.subr.bf16.mxu0 0
    %93 = vmatpush1.bf16.msra.mxu0 0
    %94 = vmatprep.subr.bf16.mxu0 0
    %95 = vmatpush1.bf16.msra.mxu0 0
    %96 = vmatprep.subr.bf16.mxu0 0
    %97 = vmatpush1.bf16.msra.mxu0 0
    %98 = vmatprep.subr.bf16.mxu0 0
    %99 = vmatpush1.bf16.msra.mxu0 0
    %100 = vmatprep.subr.bf16.mxu0 0
    %101 = vmatpush1.bf16.msra.mxu0 %v81
    %102 = vmatprep.subr.bf16.mxu0 0
    %103 = vmatpush1.bf16.msra.mxu0 %v80
    %104 = vmatprep.subr.bf16.mxu0 0
    %105 = vmatpush2.bf16.msra.mxu0 0
    %106 = vmatprep.subr.bf16.mxu0 0
    %107 = vmatpush2.bf16.msra.mxu0 0
    %108 = vmatprep.subr.bf16.mxu0 0
    %109 = vmatpush2.bf16.msra.mxu0 0
    %110 = vmatprep.subr.bf16.mxu0 0
    %111 = vmatpush2.bf16.msra.mxu0 0
    %112 = vmatprep.subr.bf16.mxu0 0
    %113 = vmatpush2.bf16.msra.mxu0 0
    %114 = vmatprep.subr.bf16.mxu0 0
    %115 = vmatpush2.bf16.msra.mxu0 0
    %116 = vmatprep.subr.bf16.mxu0 0
    %117 = vmatpush2.bf16.msra.mxu0 0
    %118 = vmatprep.subr.bf16.mxu0 0
    %119 = vmatpush2.bf16.msra.mxu0 0
    %120 = vmatprep.mubr.bf16.mxu0 0
    %121 = vmatmul.mubr.bf16.gmra.mxu0 %v86
    %v122 = vpop.f32.mrf.mxu0
    %v123 = vadd.f32 %v70, %v122
    %v124 = vpop.f32.mrf.mxu0
    %v125 = vpop.f32.mrf.mxu0
    %v126 = vadd.f32 %v70, %v125
    %v127 = vpop.f32.mrf.mxu0
    %128 = vdwg.mxu0
    %v129 = vmax.f32 %v123, 0.0
    %v130 = vmax.f32 %v126, 0.0
    %v131 = vpack.c.bf16 %v130, %v129
    %v132 = vld [vmem:[%s3] sm:$0xf]
    %v133 = vld [vmem:[%s3 + $0x4] sm:$0xf]
    %v134 = vld [vmem:[%s3 + $0x8] sm:$0xf]
    %v135 = vld [vmem:[%s3 + $0xc] sm:$0xf]
    %v136 = vld [vmem:[%s3 + $0x10] sm:$0xf]
    %v137 = vld [vmem:[%s3 + $0x14] sm:$0xf]
    %v138 = vld [vmem:[%s3 + $0x18] sm:$0xf]
    %v139 = vld [vmem:[%s3 + $0x1c] sm:$0xf]
    %v140 = vld [vmem:[%s3 + $0x20] sm:$0xf]
    %v141 = vld [vmem:[%s3 + $0x24] sm:$0xf]
    %v142 = vld [vmem:[%s3 + $0x28] sm:$0xf]
    %v143 = vld [vmem:[%s3 + $0x2c] sm:$0xf]
    %v144 = vld [vmem:[%s3 + $0x30] sm:$0xf]
    %v145 = vld [vmem:[%s3 + $0x34] sm:$0xf]
    %v146 = vld [vmem:[%s3 + $0x38] sm:$0xf]
    %v147 = vld [vmem:[%s3 + $0x3c] sm:$0xf]
    %v148 = vld [vmem:[%s4] sm:$0x1]
    %v150 = vlaneseq
    %v151 = vshrl.u32 %v150, 7
    %v152 = vsub.s32 0, %v151
    %v153 = vrot.slane %v148, %v152
    %v171 = vunpack.c.l.b16 %v132
    %v172 = vunpack.c.l.b16 %v133
    %v173 = vunpack.c.l.b16 %v134
    %v174 = vunpack.c.l.b16 %v135
    %v175 = vunpack.c.l.b16 %v136
    %v176 = vunpack.c.l.b16 %v137
    %v177 = vunpack.c.l.b16 %v138
    %v178 = vunpack.c.l.b16 %v139
    %v179 = vunpack.c.l.b16 %v140
    %v180 = vunpack.c.l.b16 %v141
    %v181 = vunpack.c.l.b16 %v142
    %v182 = vunpack.c.l.b16 %v143
    %v183 = vunpack.c.l.b16 %v144
    %v184 = vunpack.c.l.b16 %v145
    %v185 = vunpack.c.l.b16 %v146
    %v186 = vunpack.c.l.b16 %v147
    %v187 = vpack.c.b16 %v172, %v171
    %v188 = vpack.c.b16 %v174, %v173
    %v189 = vpack.c.b16 %v176, %v175
    %v190 = vpack.c.b16 %v178, %v177
    %v191 = vpack.c.b16 %v180, %v179
    %v192 = vpack.c.b16 %v182, %v181
    %v193 = vpack.c.b16 %v184, %v183
    %v194 = vpack.c.b16 %v186, %v185
    %203 = vmatprep.subr.bf16.mxu0 0
    %204 = vmatpush1.bf16.msra.mxu0 %v194
    %205 = vmatprep.subr.bf16.mxu0 0
    %206 = vmatpush1.bf16.msra.mxu0 %v193
    %207 = vmatprep.subr.bf16.mxu0 0
    %208 = vmatpush1.bf16.msra.mxu0 %v192
    %209 = vmatprep.subr.bf16.mxu0 0
    %210 = vmatpush1.bf16.msra.mxu0 %v191
    %211 = vmatprep.subr.bf16.mxu0 0
    %212 = vmatpush1.bf16.msra.mxu0 %v190
    %213 = vmatprep.subr.bf16.mxu0 0
    %214 = vmatpush1.bf16.msra.mxu0 %v189
    %215 = vmatprep.subr.bf16.mxu0 0
    %216 = vmatpush1.bf16.msra.mxu0 %v188
    %217 = vmatprep.subr.bf16.mxu0 0
    %218 = vmatpush1.bf16.msra.mxu0 %v187
    %219 = vmatprep.subr.bf16.mxu0 0
    %220 = vmatpush2.bf16.msra.mxu0 0
    %221 = vmatprep.subr.bf16.mxu0 0
    %222 = vmatpush2.bf16.msra.mxu0 0
    %223 = vmatprep.subr.bf16.mxu0 0
    %224 = vmatpush2.bf16.msra.mxu0 0
    %225 = vmatprep.subr.bf16.mxu0 0
    %226 = vmatpush2.bf16.msra.mxu0 0
    %227 = vmatprep.subr.bf16.mxu0 0
    %228 = vmatpush2.bf16.msra.mxu0 0
    %229 = vmatprep.subr.bf16.mxu0 0
    %230 = vmatpush2.bf16.msra.mxu0 0
    %231 = vmatprep.subr.bf16.mxu0 0
    %232 = vmatpush2.bf16.msra.mxu0 0
    %233 = vmatprep.subr.bf16.mxu0 0
    %234 = vmatpush2.bf16.msra.mxu0 0
    %235 = vmatprep.mubr.bf16.mxu0 0
    %236 = vmatmul.mubr.bf16.gmra.mxu0 %v131
    %v237 = vpop.f32.mrf.mxu0
    %v238 = vadd.f32 %v153, %v237
    %v239 = vpop.f32.mrf.mxu0
    %v240 = vpop.f32.mrf.mxu0
    %v241 = vadd.f32 %v153, %v240
    %v242 = vpop.f32.mrf.mxu0
    %243 = vdwg.mxu0
    %v244 = vmax.f32 %v238, 0.0
    %v245 = vmax.f32 %v241, 0.0
    %v246 = vpack.c.bf16 %v245, %v244
    %v248 = vunpack.c.l.b16 %v246
    %v249 = vunpack.c.h.b16 %v246
    %v250 = vpack.c.b16 %v248, %v248
    %v251 = vpack.c.b16 %v249, %v249
    %254 = vst [vmem:[#allocation7] sm:$0xf] %v250
    %255 = vst [vmem:[#allocation7 + $0x4] sm:$0xf] %v251
    %v256 = vld [vmem:[%s5] sm:$0xf]
    %v257 = vld [vmem:[%s5 + $0x4] sm:$0xf]
    %v258 = vld [vmem:[%s5 + $0x8] sm:$0xf]
    %v259 = vld [vmem:[%s5 + $0xc] sm:$0xf]
    %v260 = vld [vmem:[%s5 + $0x10] sm:$0xf]
    %v261 = vld [vmem:[%s5 + $0x14] sm:$0xf]
    %v262 = vld [vmem:[%s5 + $0x18] sm:$0xf]
    %v263 = vld [vmem:[%s5 + $0x1c] sm:$0xf]
    %v264 = vld [vmem:[%s5 + $0x20] sm:$0xf]
    %v265 = vld [vmem:[%s5 + $0x24] sm:$0xf]
    %v266 = vld [vmem:[%s5 + $0x28] sm:$0xf]
    %v267 = vld [vmem:[%s5 + $0x2c] sm:$0xf]
    %v268 = vld [vmem:[%s5 + $0x30] sm:$0xf]
    %v269 = vld [vmem:[%s5 + $0x34] sm:$0xf]
    %v270 = vld [vmem:[%s5 + $0x38] sm:$0xf]
    %v271 = vld [vmem:[%s5 + $0x3c] sm:$0xf]
    %v272 = vld [vmem:[%s6] sm:$0x1]
    %v274 = vlaneseq
    %v275 = vshrl.u32 %v274, 7
    %v276 = vsub.s32 0, %v275
    %v277 = vrot.slane %v272, %v276
    %v295 = vunpack.c.l.b16 %v256
    %v296 = vunpack.c.l.b16 %v257
    %v297 = vunpack.c.l.b16 %v258
    %v298 = vunpack.c.l.b16 %v259
    %v299 = vunpack.c.l.b16 %v260
    %v300 = vunpack.c.l.b16 %v261
    %v301 = vunpack.c.l.b16 %v262
    %v302 = vunpack.c.l.b16 %v263
    %v303 = vunpack.c.l.b16 %v264
    %v304 = vunpack.c.l.b16 %v265
    %v305 = vunpack.c.l.b16 %v266
    %v306 = vunpack.c.l.b16 %v267
    %v307 = vunpack.c.l.b16 %v268
    %v308 = vunpack.c.l.b16 %v269
    %v309 = vunpack.c.l.b16 %v270
    %v310 = vunpack.c.l.b16 %v271
    %v311 = vpack.c.b16 %v296, %v295
    %v312 = vpack.c.b16 %v298, %v297
    %v313 = vpack.c.b16 %v300, %v299
    %v314 = vpack.c.b16 %v302, %v301
    %v315 = vpack.c.b16 %v304, %v303
    %v316 = vpack.c.b16 %v306, %v305
    %v317 = vpack.c.b16 %v308, %v307
    %v318 = vpack.c.b16 %v310, %v309
    %327 = vmatprep.subr.bf16.mxu0 0
    %328 = vmatpush1.bf16.msra.mxu0 %v318
    %329 = vmatprep.subr.bf16.mxu0 0
    %330 = vmatpush1.bf16.msra.mxu0 %v317
    %331 = vmatprep.subr.bf16.mxu0 0
    %332 = vmatpush1.bf16.msra.mxu0 %v316
    %333 = vmatprep.subr.bf16.mxu0 0
    %334 = vmatpush1.bf16.msra.mxu0 %v315
    %335 = vmatprep.subr.bf16.mxu0 0
    %336 = vmatpush1.bf16.msra.mxu0 %v314
    %337 = vmatprep.subr.bf16.mxu0 0
    %338 = vmatpush1.bf16.msra.mxu0 %v313
    %339 = vmatprep.subr.bf16.mxu0 0
    %340 = vmatpush1.bf16.msra.mxu0 %v312
    %341 = vmatprep.subr.bf16.mxu0 0
    %342 = vmatpush1.bf16.msra.mxu0 %v311
    %343 = vmatprep.subr.bf16.mxu0 0
    %344 = vmatpush2.bf16.msra.mxu0 0
    %345 = vmatprep.subr.bf16.mxu0 0
    %346 = vmatpush2.bf16.msra.mxu0 0
    %347 = vmatprep.subr.bf16.mxu0 0
    %348 = vmatpush2.bf16.msra.mxu0 0
    %349 = vmatprep.subr.bf16.mxu0 0
    %350 = vmatpush2.bf16.msra.mxu0 0
    %351 = vmatprep.subr.bf16.mxu0 0
    %352 = vmatpush2.bf16.msra.mxu0 0
    %353 = vmatprep.subr.bf16.mxu0 0
    %354 = vmatpush2.bf16.msra.mxu0 0
    %355 = vmatprep.subr.bf16.mxu0 0
    %356 = vmatpush2.bf16.msra.mxu0 0
    %357 = vmatprep.subr.bf16.mxu0 0
    %358 = vmatpush2.bf16.msra.mxu0 0
    %359 = vmatprep.mubr.bf16.mxu0 0
    %360 = vmatmul.mubr.bf16.gmra.mxu0 %v246
    %v361 = vpop.f32.mrf.mxu0
    %v362 = vadd.f32 %v277, %v361
    %v363 = vpop.f32.mrf.mxu0
    %v364 = vpop.f32.mrf.mxu0
    %v365 = vadd.f32 %v277, %v364
    %v366 = vpop.f32.mrf.mxu0
    %367 = vdwg.mxu0
    %vm368 = vcmask 64512
    %369 = vst.msk [vmem:[%s7] sm:$0xff] %vm368, %v362
    %370 = vst.msk [vmem:[%s7 + $0x8] sm:$0xff] %vm368, %v365
    // Predicated region
    $region38: #{tpu_custom_call.1} parent=1 // pred_check
      _
    $region39: #{tpu_custom_call.1} parent=1 // pred_check_branch
      %372 = sbr.rel (0) target = $region41
    $region40: #{tpu_custom_call.1} parent=1 // pred_region
      _
    $region41: #{tpu_custom_call.1} parent=1 // pred_fallthru
      _
    // Predicated region
    $region42: #{tpu_custom_call.1} parent=1 // pred_check
      _
    $region43: #{tpu_custom_call.1} parent=1 // pred_check_branch
      %374 = sbr.rel (0) target = $region45
    $region44: #{tpu_custom_call.1} parent=1 // pred_region
      %s376 = ssub.s32 128, 128
      %377 = vsyncadd [#allocation4], %s376
      %s378 = sshll.u32 [#allocation7], 4
      %s379 = int_to_ptr.vmem [resolvable:$true] %s378
      %384 = dma.vmem_to_hbm [thread:$0]  %s379, 128, %s8, [#allocation4], 64, 64, 4
    $region45: #{tpu_custom_call.1} parent=1 // pred_fallthru
      _
    // Predicated region
    $region46: #{tpu_custom_call.1} parent=1 // pred_check
      _
    $region47: #{tpu_custom_call.1} parent=1 // pred_check_branch
      %386 = sbr.rel (0) target = $region49
    $region48: #{tpu_custom_call.1} parent=1 // pred_region
      _
    $region49: #{tpu_custom_call.1} parent=1 // pred_fallthru
      _
    // Predicated region
    $region50: #{tpu_custom_call.1} parent=1 // pred_check
      _
    $region51: #{tpu_custom_call.1} parent=1 // pred_check_branch
      %388 = sbr.rel (0) target = $region53
    $region52: #{tpu_custom_call.1} parent=1 // pred_region
      %389 = dma.done [#allocation4], 128
    $region53: #{tpu_custom_call.1} parent=1 // pred_fallthru
      _
    %390 = vsyncpa [#allocation3], 1
    %391 = vsyncpa [#allocation6], 1
    %392 = vsyncpa [#allocation4], 1

</llo_original>
